<compile_context>
chip_gen: v7x
topology: tpu7x:2x2x1
jax: 0.10.0
libtpu: 0.0.40
codegen_flags: <defaults>
</compile_context>

<pallas_src>
import math

import jax
import jax.numpy as jnp
from jax.experimental import pallas as pl
from jax.experimental.pallas import tpu as pltpu

# --- small config ---
BATCH = 2
SEQ = 8
HIDDEN = 32
VOCAB = 512            # multiple of 128 -> lane-dense output stores
LAYER_NORM_EPS = 1e-12

_GELU_C = math.sqrt(2.0 / math.pi)


def lm_head_kernel(x_ref, wt_ref, bt_ref, gamma_ref, beta_ref,
                   wd_ref, bd_ref, out_ref):
    """Single grid step: all M rows at once.

    x_ref:     (M, H)  f32   flattened hidden states
    wt_ref:    (H, H)  bf16  transform weight, pre-transposed to [in, out]
    bt_ref:    (1, H)  f32   transform bias
    gamma_ref: (1, H)  f32   LayerNorm scale
    beta_ref:  (1, H)  f32   LayerNorm shift
    wd_ref:    (H, V)  bf16  decoder weight, pre-transposed to [in, out]
    bd_ref:    (1, V)  f32   decoder bias
    out_ref:   (M, V)  f32   logits
    """
    x = x_ref[...]

    # --- transform: Linear (bf16 MXU operands, f32 accumulate) ---
    h = jnp.dot(x.astype(jnp.bfloat16), wt_ref[...],
                preferred_element_type=jnp.float32) + bt_ref[...]

    # --- GELU (tanh approximation, matches the spec's `gelu` function) ---
    h = 0.5 * h * (1.0 + jnp.tanh(_GELU_C * (h + 0.044715 * (h * h * h))))

    # --- LayerNorm (f32; centered value computed once) ---
    mean = jnp.mean(h, axis=-1, keepdims=True)
    hc = h - mean
    var = jnp.mean(hc * hc, axis=-1, keepdims=True)
    h = hc * jax.lax.rsqrt(var + LAYER_NORM_EPS)
    h = h * gamma_ref[...] + beta_ref[...]

    # --- decoder: Linear(H -> V) + bias (bf16 MXU operands, f32 accumulate) ---
    out_ref[...] = (jnp.dot(h.astype(jnp.bfloat16), wd_ref[...],
                            preferred_element_type=jnp.float32)
                    + bd_ref[...])


def bert_lm_prediction_head(hidden_states, params):
    """hidden_states: (B, S, H) f32 -> logits (B, S, V) f32."""
    B, S, H = hidden_states.shape
    V = params["w_decoder"].shape[0]
    M = B * S

    # Collapse batch*seq into M and run a single grid step: total work here is
    # far below the ~0.35 us per-step cost, so any M split is pure overhead.
    TM = M
    assert TM % 8 == 0, "row tile must be a multiple of 8"

    x2d = hidden_states.reshape(M, H)

    # Wrapper-side layout/dtype plumbing (free relative to the kernel):
    #  * weights transposed once to [in, out] and cast to bf16,
    #  * biases / LN params made 2-D for clean VMEM layout, kept f32.
    wt = params["w_transform"].T.astype(jnp.bfloat16)      # (H, H)
    bt = params["b_transform"].reshape(1, H)
    gamma = params["gamma"].reshape(1, H)
    beta = params["beta"].reshape(1, H)
    wd = params["w_decoder"].T.astype(jnp.bfloat16)         # (H, V)
    bd = params["b_decoder"].reshape(1, V)

    # Constant-index replicated operands: never re-fetched, so a single buffer
    # suffices (saves VMEM at real sizes).
    def rep(shape):
        return pl.BlockSpec(shape, lambda i: (0, 0),
                            pipeline_mode=pl.Buffered(1))

    grid_spec = pltpu.PrefetchScalarGridSpec(
        num_scalar_prefetch=0,
        grid=(M // TM,),            # == (1,)
        in_specs=[
            pl.BlockSpec((TM, H), lambda i: (i, 0)),   # x tile
            rep((H, H)),                               # transform W (bf16)
            rep((1, H)),                               # transform b
            rep((1, H)),                               # gamma
            rep((1, H)),                               # beta
            rep((H, V)),                               # decoder W (bf16)
            rep((1, V)),                               # decoder b
        ],
        out_specs=pl.BlockSpec((TM, V), lambda i: (i, 0)),
    )

    out2d = pl.pallas_call(
        lm_head_kernel,
        out_shape=jax.ShapeDtypeStruct((M, V), jnp.float32),
        grid_spec=grid_spec,
        compiler_params=pltpu.CompilerParams(
            dimension_semantics=("arbitrary",)),
    )(x2d, wt, bt, gamma, beta, wd, bd)

    return out2d.reshape(B, S, V)


def init_params(key):
    """Deterministic synthetic parameters (PyTorch [out, in] convention)."""
    ks = jax.random.split(key, 4)
    std = 0.02
    return {
        "w_transform": jax.random.normal(ks[0], (HIDDEN, HIDDEN), jnp.float32) * std,
        "b_transform": jax.random.normal(ks[1], (HIDDEN,), jnp.float32) * std,
        "gamma": jnp.ones((HIDDEN,), jnp.float32),
        "beta": jnp.zeros((HIDDEN,), jnp.float32),
        "w_decoder": jax.random.normal(ks[2], (VOCAB, HIDDEN), jnp.float32) * std,
        "b_decoder": jax.random.normal(ks[3], (VOCAB,), jnp.float32) * std,
    }


def bert_lm_prediction_head_ref(hidden_states, p):
    """Pure-JAX f32 reference for correctness check."""
    h = hidden_states @ p["w_transform"].T + p["b_transform"]
    h = 0.5 * h * (1.0 + jnp.tanh(_GELU_C * (h + 0.044715 * h ** 3)))
    mean = jnp.mean(h, axis=-1, keepdims=True)
    var = jnp.mean((h - mean) ** 2, axis=-1, keepdims=True)
    h = (h - mean) / jnp.sqrt(var + LAYER_NORM_EPS)
    h = h * p["gamma"] + p["beta"]
    return h @ p["w_decoder"].T + p["b_decoder"]


if __name__ == "__main__":
    key = jax.random.PRNGKey(0)
    k_param, k_x = jax.random.split(key)
    params = init_params(k_param)

    hidden_states = jax.random.normal(k_x, (BATCH, SEQ, HIDDEN), jnp.float32)

    out = bert_lm_prediction_head(hidden_states, params)
    out = jax.block_until_ready(out)

    ref = bert_lm_prediction_head_ref(hidden_states, params)
    assert out.shape == (BATCH, SEQ, VOCAB)
    # Tolerance loosened vs. the pure-f32 version because the matmuls run with
    # bf16 operands (f32 accumulation).
    assert jnp.allclose(out, ref, atol=3e-2, rtol=3e-2), "mismatch vs reference"

    print("KERNEL_OK")
</pallas_src>

<mosaic_0001>
module attributes {stable_mosaic.version = 11 : i64} {
  func.func @lm_head_kernel(%arg0: i32, %arg1: memref<16x32xf32, #tpu.memory_space<vmem>>, %arg2: memref<32x32xbf16, #tpu.memory_space<vmem>>, %arg3: memref<1x32xf32, #tpu.memory_space<vmem>>, %arg4: memref<1x32xf32, #tpu.memory_space<vmem>>, %arg5: memref<1x32xf32, #tpu.memory_space<vmem>>, %arg6: memref<32x512xbf16, #tpu.memory_space<vmem>>, %arg7: memref<1x512xf32, #tpu.memory_space<vmem>>, %arg8: memref<16x512xf32, #tpu.memory_space<vmem>>) attributes {dimension_semantics = [#tpu.dimension_semantics<arbitrary>], iteration_bounds = array<i64: 1>, scalar_prefetch = 0 : i64, scratch_operands = 0 : i64, tpu.core_type = #tpu.core_type<tc>, window_params = [{transform_indices = @transform_0, window_bounds = array<i64: 16, 32>}, {pipeline_mode = #tpu.pipeline_mode<synchronous>, transform_indices = @transform_1, window_bounds = array<i64: 32, 32>}, {pipeline_mode = #tpu.pipeline_mode<synchronous>, transform_indices = @transform_2, window_bounds = array<i64: 1, 32>}, {pipeline_mode = #tpu.pipeline_mode<synchronous>, transform_indices = @transform_3, window_bounds = array<i64: 1, 32>}, {pipeline_mode = #tpu.pipeline_mode<synchronous>, transform_indices = @transform_4, window_bounds = array<i64: 1, 32>}, {pipeline_mode = #tpu.pipeline_mode<synchronous>, transform_indices = @transform_5, window_bounds = array<i64: 32, 512>}, {pipeline_mode = #tpu.pipeline_mode<synchronous>, transform_indices = @transform_6, window_bounds = array<i64: 1, 512>}, {transform_indices = @transform_7, window_bounds = array<i64: 16, 512>}]} {
    %c0 = arith.constant 0 : index
    %c0_0 = arith.constant 0 : index
    %0 = vector.load %arg1[%c0, %c0_0] : memref<16x32xf32, #tpu.memory_space<vmem>>, vector<16x32xf32>
    %1 = arith.truncf %0 : vector<16x32xf32> to vector<16x32xbf16>
    %c0_1 = arith.constant 0 : index
    %c0_2 = arith.constant 0 : index
    %2 = vector.load %arg2[%c0_1, %c0_2] : memref<32x32xbf16, #tpu.memory_space<vmem>>, vector<32x32xbf16>
    %cst = arith.constant dense<0.000000e+00> : vector<16x32xf32>
    %3 = tpu.matmul %1, %2, %cst {dimension_numbers = #tpu.dot_dimension_numbers<[1], [0], [0], [1], [0, 0, 1, 1], [], []>} : vector<16x32xbf16>, vector<32x32xbf16>, vector<16x32xf32> -> vector<16x32xf32>
    %c0_3 = arith.constant 0 : index
    %c0_4 = arith.constant 0 : index
    %4 = vector.load %arg3[%c0_3, %c0_4] : memref<1x32xf32, #tpu.memory_space<vmem>>, vector<1x32xf32>
    %5 = vector.broadcast %4 : vector<1x32xf32> to vector<16x32xf32>
    %6 = arith.addf %3, %5 : vector<16x32xf32>
    %cst_5 = arith.constant 5.000000e-01 : f32
    %7 = vector.broadcast %cst_5 : f32 to vector<16x32xf32>
    %8 = arith.mulf %7, %6 : vector<16x32xf32>
    %9 = arith.mulf %6, %6 : vector<16x32xf32>
    %10 = arith.mulf %9, %6 : vector<16x32xf32>
    %cst_6 = arith.constant 4.471500e-02 : f32
    %11 = vector.broadcast %cst_6 : f32 to vector<16x32xf32>
    %12 = arith.mulf %11, %10 : vector<16x32xf32>
    %13 = arith.addf %6, %12 : vector<16x32xf32>
    %cst_7 = arith.constant 0.797884583 : f32
    %14 = vector.broadcast %cst_7 : f32 to vector<16x32xf32>
    %15 = arith.mulf %14, %13 : vector<16x32xf32>
    %16 = math.tanh %15 : vector<16x32xf32>
    %cst_8 = arith.constant 1.000000e+00 : f32
    %17 = vector.broadcast %cst_8 : f32 to vector<16x32xf32>
    %18 = arith.addf %17, %16 : vector<16x32xf32>
    %19 = arith.mulf %8, %18 : vector<16x32xf32>
    %cst_9 = arith.constant dense<0.000000e+00> : vector<16xf32>
    %20 = vector.multi_reduction <add>, %19, %cst_9 [1] : vector<16x32xf32> to vector<16xf32>
    %21 = vector.shape_cast %20 : vector<16xf32> to vector<16x1xf32>
    %cst_10 = arith.constant 3.200000e+01 : f32
    %22 = vector.broadcast %cst_10 : f32 to vector<16x1xf32>
    %23 = arith.divf %21, %22 : vector<16x1xf32>
    %24 = vector.broadcast %23 : vector<16x1xf32> to vector<16x32xf32>
    %25 = arith.subf %19, %24 : vector<16x32xf32>
    %26 = arith.mulf %25, %25 : vector<16x32xf32>
    %cst_11 = arith.constant dense<0.000000e+00> : vector<16xf32>
    %27 = vector.multi_reduction <add>, %26, %cst_11 [1] : vector<16x32xf32> to vector<16xf32>
    %28 = vector.shape_cast %27 : vector<16xf32> to vector<16x1xf32>
    %cst_12 = arith.constant 3.200000e+01 : f32
    %29 = vector.broadcast %cst_12 : f32 to vector<16x1xf32>
    %30 = arith.divf %28, %29 : vector<16x1xf32>
    %cst_13 = arith.constant 9.99999996E-13 : f32
    %31 = vector.broadcast %cst_13 : f32 to vector<16x1xf32>
    %32 = arith.addf %30, %31 : vector<16x1xf32>
    %33 = math.rsqrt %32 : vector<16x1xf32>
    %34 = vector.broadcast %33 : vector<16x1xf32> to vector<16x32xf32>
    %35 = arith.mulf %25, %34 : vector<16x32xf32>
    %c0_14 = arith.constant 0 : index
    %c0_15 = arith.constant 0 : index
    %36 = vector.load %arg4[%c0_14, %c0_15] : memref<1x32xf32, #tpu.memory_space<vmem>>, vector<1x32xf32>
    %37 = vector.broadcast %36 : vector<1x32xf32> to vector<16x32xf32>
    %38 = arith.mulf %35, %37 : vector<16x32xf32>
    %c0_16 = arith.constant 0 : index
    %c0_17 = arith.constant 0 : index
    %39 = vector.load %arg5[%c0_16, %c0_17] : memref<1x32xf32, #tpu.memory_space<vmem>>, vector<1x32xf32>
    %40 = vector.broadcast %39 : vector<1x32xf32> to vector<16x32xf32>
    %41 = arith.addf %38, %40 : vector<16x32xf32>
    %42 = arith.truncf %41 : vector<16x32xf32> to vector<16x32xbf16>
    %c0_18 = arith.constant 0 : index
    %c0_19 = arith.constant 0 : index
    %43 = vector.load %arg6[%c0_18, %c0_19] : memref<32x512xbf16, #tpu.memory_space<vmem>>, vector<32x512xbf16>
    %cst_20 = arith.constant dense<0.000000e+00> : vector<16x512xf32>
    %44 = tpu.matmul %42, %43, %cst_20 {dimension_numbers = #tpu.dot_dimension_numbers<[1], [0], [0], [1], [0, 0, 1, 1], [], []>} : vector<16x32xbf16>, vector<32x512xbf16>, vector<16x512xf32> -> vector<16x512xf32>
    %c0_21 = arith.constant 0 : index
    %c0_22 = arith.constant 0 : index
    %45 = vector.load %arg7[%c0_21, %c0_22] : memref<1x512xf32, #tpu.memory_space<vmem>>, vector<1x512xf32>
    %46 = vector.broadcast %45 : vector<1x512xf32> to vector<16x512xf32>
    %47 = arith.addf %44, %46 : vector<16x512xf32>
    %c0_23 = arith.constant 0 : index
    %c0_24 = arith.constant 0 : index
    %48 = vector.load %arg8[%c0_23, %c0_24] : memref<16x512xf32, #tpu.memory_space<vmem>>, vector<16x512xf32>
    tpu.vector_store %arg8[%c0_23, %c0_24], %47 {strides = array<i32>} : memref<16x512xf32, #tpu.memory_space<vmem>>, vector<16x512xf32>,
    return
  }
  func.func @transform_0(%arg0: i32) -> (i32, i32) {
    %c0_i32 = arith.constant 0 : i32
    %c0_i32_0 = arith.constant 0 : i32
    return %arg0, %c0_i32 : i32, i32
  }
  func.func @transform_1(%arg0: i32) -> (i32, i32) {
    %c0_i32 = arith.constant 0 : i32
    %c0_i32_0 = arith.constant 0 : i32
    %c0_i32_1 = arith.constant 0 : i32
    return %c0_i32, %c0_i32_0 : i32, i32
  }
  func.func @transform_2(%arg0: i32) -> (i32, i32) {
    %c0_i32 = arith.constant 0 : i32
    %c0_i32_0 = arith.constant 0 : i32
    %c0_i32_1 = arith.constant 0 : i32
    return %c0_i32, %c0_i32_0 : i32, i32
  }
  func.func @transform_3(%arg0: i32) -> (i32, i32) {
    %c0_i32 = arith.constant 0 : i32
    %c0_i32_0 = arith.constant 0 : i32
    %c0_i32_1 = arith.constant 0 : i32
    return %c0_i32, %c0_i32_0 : i32, i32
  }
  func.func @transform_4(%arg0: i32) -> (i32, i32) {
    %c0_i32 = arith.constant 0 : i32
    %c0_i32_0 = arith.constant 0 : i32
    %c0_i32_1 = arith.constant 0 : i32
    return %c0_i32, %c0_i32_0 : i32, i32
  }
  func.func @transform_5(%arg0: i32) -> (i32, i32) {
    %c0_i32 = arith.constant 0 : i32
    %c0_i32_0 = arith.constant 0 : i32
    %c0_i32_1 = arith.constant 0 : i32
    return %c0_i32, %c0_i32_0 : i32, i32
  }
  func.func @transform_6(%arg0: i32) -> (i32, i32) {
    %c0_i32 = arith.constant 0 : i32
    %c0_i32_0 = arith.constant 0 : i32
    %c0_i32_1 = arith.constant 0 : i32
    return %c0_i32, %c0_i32_0 : i32, i32
  }
  func.func @transform_7(%arg0: i32) -> (i32, i32) {
    %c0_i32 = arith.constant 0 : i32
    %c0_i32_0 = arith.constant 0 : i32
    return %arg0, %c0_i32 : i32, i32
  }
}

</mosaic_0001>

<llo_original>
// kernel: tpu_custom_call.1
$region0: #{tpu_custom_call.1}
  #allocation0 [shape = 'u32[]', space=smem, size = 0x4, offset = 0x4, fixed_abs, tag = 'smem constant byte address 0x4 - core index']
  #allocation1 [shape = 'u32[144,128]{1,0:T(1,128)}', space=vmem, size = 0x12000, scoped, tag = 'internal scratch']
  %s0 = inlined_call_operand.hbm [shape: f32[16,32], index: 0, kind: input, shape index: {}]
  %s1 = inlined_call_operand.hbm [shape: bf16[32,32], index: 1, kind: input, shape index: {}]
  %s2 = inlined_call_operand.vmem [shape: f32[1,32], index: 2, kind: input, shape index: {}]
  %s3 = inlined_call_operand.vmem [shape: f32[1,32], index: 3, kind: input, shape index: {}]
  %s4 = inlined_call_operand.vmem [shape: f32[1,32], index: 4, kind: input, shape index: {}]
  %s5 = inlined_call_operand.hbm [shape: bf16[32,512], index: 5, kind: input, shape index: {}]
  %s6 = inlined_call_operand.vmem [shape: f32[1,512], index: 6, kind: input, shape index: {}]
  %s7 = inlined_call_operand.hbm [shape: f32[16,512], index: 7, kind: output, shape index: {}]
  %s8 = sld [smem:[#allocation0]]
  $region50: #{tpu_custom_call.1} parent=0
    _
  %s10 = ssub.s32 1, %s8
  %s11 = scalar_select 0, %s10, %s8
  $region1: #{tpu_custom_call.1} parent=0
    #allocation2 [shape = 'u8[8192]{0}', space=vmem, size = 0x2000, scoped, tag = 'input window, operand 0, single buffered']
    #allocation3 [shape = 's32[1]{0}', space=sflag, size = 0x4, scoped, tag = 'scoped memory for tpu_custom_call.1']
    #allocation4 [shape = 's32[1]{0}', space=sflag, size = 0x4, scoped, tag = 'scoped memory for tpu_custom_call.1']
    #allocation5 [shape = 'u8[8192]{0}', space=vmem, size = 0x2000, scoped, tag = 'input window, operand 1, single buffered']
    #allocation6 [shape = 's32[1]{0}', space=sflag, size = 0x4, scoped, tag = 'scoped memory for tpu_custom_call.1']
    #allocation7 [shape = 'u8[32768]{0}', space=vmem, size = 0x8000, scoped, tag = 'input window, operand 5, single buffered']
    #allocation8 [shape = 'u8[32768]{0}', space=vmem, size = 0x8000, scoped, tag = 'output window, operand 0, single buffered']
    %12 = vsyncpa [#allocation3], 0
    %13 = vsyncpa [#allocation6], 0
    %14 = vsyncpa [#allocation4], 0
    // Predicated region
    $region2: #{tpu_custom_call.1} parent=1 // pred_check
      _
    $region3: #{tpu_custom_call.1} parent=1 // pred_check_branch
      %16 = sbr.rel (0) target = $region5
    $region4: #{tpu_custom_call.1} parent=1 // pred_region
      %s18 = ssub.s32 256, 256
      %19 = vsyncadd [#allocation3], %s18
      %s20 = sshll.u32 [#allocation2], 4
      %s21 = int_to_ptr.vmem [resolvable:$true] %s20
      %26 = dma.hbm_to_vmem [thread:$0]  %s0, 256, %s21, [#allocation3], 128, 128, 8
    $region5: #{tpu_custom_call.1} parent=1 // pred_fallthru
      _
    // Predicated region
    $region6: #{tpu_custom_call.1} parent=1 // pred_check
      _
    $region7: #{tpu_custom_call.1} parent=1 // pred_check_branch
      %28 = sbr.rel (0) target = $region9
    $region8: #{tpu_custom_call.1} parent=1 // pred_region
      %s30 = ssub.s32 256, 256
      %31 = vsyncadd [#allocation6], %s30
      %s32 = sshll.u32 [#allocation5], 4
      %s33 = int_to_ptr.vmem [resolvable:$true] %s32
      %38 = dma.hbm_to_vmem [thread:$0]  %s1, 256, %s33, [#allocation6], 64, 64, 4
    $region9: #{tpu_custom_call.1} parent=1 // pred_fallthru
      _
    // Predicated region
    $region10: #{tpu_custom_call.1} parent=1 // pred_check
      _
    $region11: #{tpu_custom_call.1} parent=1 // pred_check_branch
      %40 = sbr.rel (0) target = $region13
    $region12: #{tpu_custom_call.1} parent=1 // pred_region
      _
    $region13: #{tpu_custom_call.1} parent=1 // pred_fallthru
      _
    // Predicated region
    $region14: #{tpu_custom_call.1} parent=1 // pred_check
      _
    $region15: #{tpu_custom_call.1} parent=1 // pred_check_branch
      %42 = sbr.rel (0) target = $region17
    $region16: #{tpu_custom_call.1} parent=1 // pred_region
      _
    $region17: #{tpu_custom_call.1} parent=1 // pred_fallthru
      _
    // Predicated region
    $region18: #{tpu_custom_call.1} parent=1 // pred_check
      _
    $region19: #{tpu_custom_call.1} parent=1 // pred_check_branch
      %44 = sbr.rel (0) target = $region21
    $region20: #{tpu_custom_call.1} parent=1 // pred_region
      _
    $region21: #{tpu_custom_call.1} parent=1 // pred_fallthru
      _
    // Predicated region
    $region22: #{tpu_custom_call.1} parent=1 // pred_check
      _
    $region23: #{tpu_custom_call.1} parent=1 // pred_check_branch
      %46 = sbr.rel (0) target = $region25
    $region24: #{tpu_custom_call.1} parent=1 // pred_region
      %s48 = ssub.s32 1024, 1024
      %49 = vsyncadd [#allocation6], %s48
      %s50 = sshll.u32 [#allocation7], 4
      %s51 = int_to_ptr.vmem [resolvable:$true] %s50
      %56 = dma.hbm_to_vmem [thread:$0]  %s5, 1024, %s51, [#allocation6], 256, 256, 16
    $region25: #{tpu_custom_call.1} parent=1 // pred_fallthru
      _
    // Predicated region
    $region26: #{tpu_custom_call.1} parent=1 // pred_check
      _
    $region27: #{tpu_custom_call.1} parent=1 // pred_check_branch
      %58 = sbr.rel (0) target = $region29
    $region28: #{tpu_custom_call.1} parent=1 // pred_region
      _
    $region29: #{tpu_custom_call.1} parent=1 // pred_fallthru
      _
    // Predicated region
    $region30: #{tpu_custom_call.1} parent=1 // pred_check
      _
    $region31: #{tpu_custom_call.1} parent=1 // pred_check_branch
      %60 = sbr.rel (0) target = $region33
    $region32: #{tpu_custom_call.1} parent=1 // pred_region
      %61 = dma.done [#allocation3], 256
    $region33: #{tpu_custom_call.1} parent=1 // pred_fallthru
      _
    // Predicated region
    $region34: #{tpu_custom_call.1} parent=1 // pred_check
      _
    $region35: #{tpu_custom_call.1} parent=1 // pred_check_branch
      %63 = sbr.rel (0) target = $region37
    $region36: #{tpu_custom_call.1} parent=1 // pred_region
      %64 = dma.done [#allocation6], 256
    $region37: #{tpu_custom_call.1} parent=1 // pred_fallthru
      _
    // Predicated region
    $region38: #{tpu_custom_call.1} parent=1 // pred_check
      _
    $region39: #{tpu_custom_call.1} parent=1 // pred_check_branch
      %66 = sbr.rel (0) target = $region41
    $region40: #{tpu_custom_call.1} parent=1 // pred_region
      %67 = dma.done [#allocation6], 1024
    $region41: #{tpu_custom_call.1} parent=1 // pred_fallthru
      _
    %v69 = vld [vmem:[#allocation2] sm:$0xff]
    %v70 = vld [vmem:[#allocation2 + $0x8] sm:$0xff]
    %v71 = vpack.c.bf16 %v70, %v69
    %v72 = vld [vmem:[#allocation5] sm:$0xf]
    %v73 = vld [vmem:[#allocation5 + $0x4] sm:$0xf]
    %v74 = vld [vmem:[#allocation5 + $0x8] sm:$0xf]
    %v75 = vld [vmem:[#allocation5 + $0xc] sm:$0xf]
    %v76 = vld [vmem:[%s2] sm:$0x1]
    %v78 = vlaneseq
    %v79 = vshrl.u32 %v78, 7
    %v80 = vsub.s32 0, %v79
    %v81 = vrot.slane %v76, %v80
    %v87 = vunpack.c.l.b16 %v72
    %v88 = vunpack.c.l.b16 %v73
    %v89 = vunpack.c.l.b16 %v74
    %v90 = vunpack.c.l.b16 %v75
    %v91 = vpack.c.b16 %v88, %v87
    %v92 = vpack.c.b16 %v90, %v89
    %vm95 = vcmask 261120
    %v97 = vsel %vm95, %v71, 0
    %99 = vmatprep.subr.bf16.mxu0 0
    %100 = vmatpush1.bf16.msra.mxu0 %v91
    %101 = vmatprep.subr.bf16.mxu0 0
    %102 = vmatpush1.bf16.msra.mxu0 %v92
    %103 = vmatprep.subr.bf16.mxu0 0
    %104 = vmatpush1.bf16.msra.mxu0 0
    %105 = vmatprep.subr.bf16.mxu0 0
    %106 = vmatpush1.bf16.msra.mxu0 0
    %107 = vmatprep.subr.bf16.mxu0 0
    %108 = vmatpush1.bf16.msra.mxu0 0
    %109 = vmatprep.subr.bf16.mxu0 0
    %110 = vmatpush1.bf16.msra.mxu0 0
    %111 = vmatprep.subr.bf16.mxu0 0
    %112 = vmatpush1.bf16.msra.mxu0 0
    %113 = vmatprep.subr.bf16.mxu0 0
    %114 = vmatpush1.bf16.msra.mxu0 0
    %115 = vmatprep.subr.bf16.mxu0 0
    %116 = vmatpush1.bf16.msra.mxu0 0
    %117 = vmatprep.subr.bf16.mxu0 0
    %118 = vmatpush1.bf16.msra.mxu0 0
    %119 = vmatprep.subr.bf16.mxu0 0
    %120 = vmatpush1.bf16.msra.mxu0 0
    %121 = vmatprep.subr.bf16.mxu0 0
    %122 = vmatpush1.bf16.msra.mxu0 0
    %123 = vmatprep.subr.bf16.mxu0 0
    %124 = vmatpush1.bf16.msra.mxu0 0
    %125 = vmatprep.subr.bf16.mxu0 0
    %126 = vmatpush1.bf16.msra.mxu0 0
    %127 = vmatprep.subr.bf16.mxu0 0
    %128 = vmatpush1.bf16.msra.mxu0 0
    %129 = vmatprep.subr.bf16.mxu0 0
    %130 = vmatpush1.bf16.msra.mxu0 0
    %131 = vmatprep.mubr.bf16.mxu0 0
    %132 = vmatmul.mubr.bf16.gmra.mrb[0].mxu0 %v97
    %v133 = vpop.f32.mrb[0].mxu0
    %v134 = vadd.f32 %v81, %v133
    %v135 = vpop.f32.mrb[0].mxu0
    %v136 = vpop.f32.mrb[0].mxu0
    %v137 = vadd.f32 %v81, %v136
    %v138 = vpop.f32.mrb[0].mxu0
    %139 = vdwg.mxu0
    %v140 = vmul.f32 %v134, 0.5
    %v141 = vmul.f32 %v137, 0.5
    %v142 = vmul.f32 %v134, %v134
    %v143 = vmul.f32 %v137, %v137
    %v144 = vmul.f32 %v142, %v134
    %v145 = vmul.f32 %v143, %v137
    %v146 = vmul.f32 %v144, 0.044715
    %v147 = vmul.f32 %v145, 0.044715
    %v148 = vadd.f32 %v134, %v146
    %v149 = vadd.f32 %v137, %v147
    %v150 = vmul.f32 %v148, 0.7978846
    %v151 = vmul.f32 %v149, 0.7978846
    %v152 = vtanh.pop %v150
    %v153 = vtanh.pop %v151
    %v154 = vadd.f32 %v152, 1.0
    %v155 = vadd.f32 %v153, 1.0
    %v156 = vmul.f32 %v140, %v154
    %v157 = vmul.f32 %v141, %v155
    %v158 = vsel %vm95, %v156, 0.0
    %159 = vadd.xlane.f32.xlu0 %v158
    %v160 = vpop.xlane.xlu0 %159
    %v161 = vsel %vm95, %v157, 0.0
    %162 = vadd.xlane.f32.xlu0 %v161
    %v163 = vpop.xlane.xlu0 %162
    %v164 = vrcp.pop 32.0
    %v165 = vmul.f32 %v160, %v164
    %v166 = vmul.f32 %v163, %v164
    %v167 = vsub.f32 %v156, %v165
    %v168 = vsub.f32 %v157, %v166
    %v169 = vmul.f32 %v167, %v167
    %v170 = vmul.f32 %v168, %v168
    %v171 = vsel %vm95, %v169, 0.0
    %172 = vadd.xlane.f32.xlu0 %v171
    %v173 = vpop.xlane.xlu0 %172
    %v174 = vsel %vm95, %v170, 0.0
    %175 = vadd.xlane.f32.xlu0 %v174
    %v176 = vpop.xlane.xlu0 %175
    %v177 = vmul.f32 %v173, %v164
    %v178 = vmul.f32 %v176, %v164
    %v179 = vadd.f32 %v177, 1e-12
    %v180 = vadd.f32 %v178, 1e-12
    %v181 = vrsqrt.pop %v179
    %v182 = vrsqrt.pop %v180
    %v183 = vmul.f32 %v167, %v181
    %v184 = vmul.f32 %v168, %v182
    %v185 = vld [vmem:[%s3] sm:$0x1]
    %v187 = vlaneseq
    %v188 = vshrl.u32 %v187, 7
    %v189 = vsub.s32 0, %v188
    %v190 = vrot.slane %v185, %v189
    %v192 = vmul.f32 %v183, %v190
    %v193 = vmul.f32 %v184, %v190
    %v194 = vld [vmem:[%s4] sm:$0x1]
    %v196 = vlaneseq
    %v197 = vshrl.u32 %v196, 7
    %v198 = vsub.s32 0, %v197
    %v199 = vrot.slane %v194, %v198
    %v201 = vadd.f32 %v192, %v199
    %v202 = vadd.f32 %v193, %v199
    %v203 = vpack.c.bf16 %v202, %v201
    %v204 = vld [vmem:[#allocation7] sm:$0xff]
    %v205 = vld [vmem:[#allocation7 + $0x8] sm:$0xff]
    %v206 = vld [vmem:[#allocation7 + $0x10] sm:$0xff]
    %v207 = vld [vmem:[#allocation7 + $0x18] sm:$0xff]
    %v208 = vld [vmem:[#allocation7 + $0x20] sm:$0xff]
    %v209 = vld [vmem:[#allocation7 + $0x28] sm:$0xff]
    %v210 = vld [vmem:[#allocation7 + $0x30] sm:$0xff]
    %v211 = vld [vmem:[#allocation7 + $0x38] sm:$0xff]
    %v212 = vld [vmem:[%s6] sm:$0xf]
    %v214 = vlaneseq
    %v215 = vshrl.u32 %v214, 7
    %v216 = vsub.s32 0, %v215
    %v217 = vrot.slane %v212, %v216
    %v218 = vlaneseq
    %v219 = vshrl.u32 %v218, 7
    %v220 = vsub.s32 1, %v219
    %v221 = vrot.slane %v212, %v220
    %v222 = vlaneseq
    %v223 = vshrl.u32 %v222, 7
    %v224 = vsub.s32 2, %v223
    %v225 = vrot.slane %v212, %v224
    %v226 = vlaneseq
    %v227 = vshrl.u32 %v226, 7
    %v228 = vsub.s32 3, %v227
    %v229 = vrot.slane %v212, %v228
    %v242 = vunpack.c.l.b16 %v204
    %v243 = vunpack.c.h.b16 %v204
    %v244 = vunpack.c.l.b16 %v205
    %v245 = vunpack.c.h.b16 %v205
    %v246 = vunpack.c.l.b16 %v206
    %v247 = vunpack.c.h.b16 %v206
    %v248 = vunpack.c.l.b16 %v207
    %v249 = vunpack.c.h.b16 %v207
    %v250 = vunpack.c.l.b16 %v208
    %v251 = vunpack.c.h.b16 %v208
    %v252 = vunpack.c.l.b16 %v209
    %v253 = vunpack.c.h.b16 %v209
    %v254 = vunpack.c.l.b16 %v210
    %v255 = vunpack.c.h.b16 %v210
    %v256 = vunpack.c.l.b16 %v211
    %v257 = vunpack.c.h.b16 %v211
    %v258 = vpack.c.b16 %v246, %v242
    %v259 = vpack.c.b16 %v247, %v243
    %v260 = vpack.c.b16 %v248, %v244
    %v261 = vpack.c.b16 %v249, %v245
    %v262 = vpack.c.b16 %v254, %v250
    %v263 = vpack.c.b16 %v255, %v251
    %v264 = vpack.c.b16 %v256, %v252
    %v265 = vpack.c.b16 %v257, %v253
    %v275 = vsel %vm95, %v203, 0
    %277 = vmatprep.subr.bf16.mxu0 %v259
    %278 = vmatpush1.bf16.msra.mxu0 %v258
    %279 = vmatprep.subr.bf16.mxu0 %v263
    %280 = vmatpush1.bf16.msra.mxu0 %v262
    %281 = vmatprep.subr.bf16.mxu0 0
    %282 = vmatpush1.bf16.msra.mxu0 0
    %283 = vmatprep.subr.bf16.mxu0 0
    %284 = vmatpush1.bf16.msra.mxu0 0
    %285 = vmatprep.subr.bf16.mxu0 0
    %286 = vmatpush1.bf16.msra.mxu0 0
    %287 = vmatprep.subr.bf16.mxu0 0
    %288 = vmatpush1.bf16.msra.mxu0 0
    %289 = vmatprep.subr.bf16.mxu0 0
    %290 = vmatpush1.bf16.msra.mxu0 0
    %291 = vmatprep.subr.bf16.mxu0 0
    %292 = vmatpush1.bf16.msra.mxu0 0
    %293 = vmatprep.subr.bf16.mxu0 0
    %294 = vmatpush1.bf16.msra.mxu0 0
    %295 = vmatprep.subr.bf16.mxu0 0
    %296 = vmatpush1.bf16.msra.mxu0 0
    %297 = vmatprep.subr.bf16.mxu0 0
    %298 = vmatpush1.bf16.msra.mxu0 0
    %299 = vmatprep.subr.bf16.mxu0 0
    %300 = vmatpush1.bf16.msra.mxu0 0
    %301 = vmatprep.subr.bf16.mxu0 0
    %302 = vmatpush1.bf16.msra.mxu0 0
    %303 = vmatprep.subr.bf16.mxu0 0
    %304 = vmatpush1.bf16.msra.mxu0 0
    %305 = vmatprep.subr.bf16.mxu0 0
    %306 = vmatpush1.bf16.msra.mxu0 0
    %307 = vmatprep.subr.bf16.mxu0 0
    %308 = vmatpush1.bf16.msra.mxu0 0
    %309 = vmatprep.mubr.bf16.mxu0 0
    %310 = vmatmul.mubr.bf16.gmra.mrb[0].mxu0 %v275
    %v311 = vpop.f32.mrb[0].mxu0
    %v312 = vadd.f32 %v217, %v311
    %v313 = vpop.f32.mrb[0].mxu0
    %v314 = vadd.f32 %v221, %v313
    %v315 = vpop.f32.mrb[0].mxu0
    %v316 = vadd.f32 %v217, %v315
    %v317 = vpop.f32.mrb[0].mxu0
    %v318 = vadd.f32 %v221, %v317
    %319 = vdwg.mxu0
    %320 = vmatprep.subr.bf16.mxu0 %v261
    %321 = vmatpush1.bf16.msra.mxu0 %v260
    %322 = vmatprep.subr.bf16.mxu0 %v265
    %323 = vmatpush1.bf16.msra.mxu0 %v264
    %324 = vmatprep.subr.bf16.mxu0 0
    %325 = vmatpush1.bf16.msra.mxu0 0
    %326 = vmatprep.subr.bf16.mxu0 0
    %327 = vmatpush1.bf16.msra.mxu0 0
    %328 = vmatprep.subr.bf16.mxu0 0
    %329 = vmatpush1.bf16.msra.mxu0 0
    %330 = vmatprep.subr.bf16.mxu0 0
    %331 = vmatpush1.bf16.msra.mxu0 0
    %332 = vmatprep.subr.bf16.mxu0 0
    %333 = vmatpush1.bf16.msra.mxu0 0
    %334 = vmatprep.subr.bf16.mxu0 0
    %335 = vmatpush1.bf16.msra.mxu0 0
    %336 = vmatprep.subr.bf16.mxu0 0
    %337 = vmatpush1.bf16.msra.mxu0 0
    %338 = vmatprep.subr.bf16.mxu0 0
    %339 = vmatpush1.bf16.msra.mxu0 0
    %340 = vmatprep.subr.bf16.mxu0 0
    %341 = vmatpush1.bf16.msra.mxu0 0
    %342 = vmatprep.subr.bf16.mxu0 0
    %343 = vmatpush1.bf16.msra.mxu0 0
    %344 = vmatprep.subr.bf16.mxu0 0
    %345 = vmatpush1.bf16.msra.mxu0 0
    %346 = vmatprep.subr.bf16.mxu0 0
    %347 = vmatpush1.bf16.msra.mxu0 0
    %348 = vmatprep.subr.bf16.mxu0 0
    %349 = vmatpush1.bf16.msra.mxu0 0
    %350 = vmatprep.subr.bf16.mxu0 0
    %351 = vmatpush1.bf16.msra.mxu0 0
    %352 = vmatprep.mubr.bf16.mxu0 0
    %353 = vmatmul.mubr.bf16.gmra.mrb[0].mxu0 %v275
    %v354 = vpop.f32.mrb[0].mxu0
    %v355 = vadd.f32 %v225, %v354
    %v356 = vpop.f32.mrb[0].mxu0
    %v357 = vadd.f32 %v229, %v356
    %v358 = vpop.f32.mrb[0].mxu0
    %v359 = vadd.f32 %v225, %v358
    %v360 = vpop.f32.mrb[0].mxu0
    %v361 = vadd.f32 %v229, %v360
    %362 = vdwg.mxu0
    %363 = vst [vmem:[#allocation8] sm:$0xff] %v312
    %364 = vst [vmem:[#allocation8 + $0x8] sm:$0xff] %v314
    %365 = vst [vmem:[#allocation8 + $0x10] sm:$0xff] %v355
    %366 = vst [vmem:[#allocation8 + $0x18] sm:$0xff] %v357
    %367 = vst [vmem:[#allocation8 + $0x20] sm:$0xff] %v316
    %368 = vst [vmem:[#allocation8 + $0x28] sm:$0xff] %v318
    %369 = vst [vmem:[#allocation8 + $0x30] sm:$0xff] %v359
    %370 = vst [vmem:[#allocation8 + $0x38] sm:$0xff] %v361
    // Predicated region
    $region42: #{tpu_custom_call.1} parent=1 // pred_check
      _
    $region43: #{tpu_custom_call.1} parent=1 // pred_check_branch
      %372 = sbr.rel (0) target = $region45
    $region44: #{tpu_custom_call.1} parent=1 // pred_region
      %s374 = ssub.s32 1024, 1024
      %375 = vsyncadd [#allocation4], %s374
      %s376 = sshll.u32 [#allocation8], 4
      %s377 = int_to_ptr.vmem [resolvable:$true] %s376
      %382 = dma.vmem_to_hbm [thread:$0]  %s377, 1024, %s7, [#allocation4], 512, 512, 32
    $region45: #{tpu_custom_call.1} parent=1 // pred_fallthru
      _
    // Predicated region
    $region46: #{tpu_custom_call.1} parent=1 // pred_check
      _
    $region47: #{tpu_custom_call.1} parent=1 // pred_check_branch
      %384 = sbr.rel (0) target = $region49
    $region48: #{tpu_custom_call.1} parent=1 // pred_region
      %385 = dma.done [#allocation4], 1024
    $region49: #{tpu_custom_call.1} parent=1 // pred_fallthru
      _
    %386 = vsyncpa [#allocation3], 1
    %387 = vsyncpa [#allocation6], 1
    %388 = vsyncpa [#allocation4], 1

</llo_original>
